<compile_context>
chip_gen: v7x
topology: tpu7x:2x2x1
jax: 0.10.0
libtpu: 0.0.40
codegen_flags: <defaults>
</compile_context>

<pallas_src>
import functools

import jax
import jax.numpy as jnp
from jax.experimental import pallas as pl
from jax.experimental.pallas import tpu as pltpu

HIDDEN = 128


def _round_up(x, m):
    return (x + m - 1) // m * m


def detect_num_tensorcores():
    """Best-effort TensorCore-per-chip count (2 on v7x, 1 on v5e/v6e)."""
    try:
        info = pltpu.get_tpu_info()
        for attr in ("tensorcores_per_chip", "num_tensorcores", "num_cores"):
            n = getattr(info, attr, None)
            if isinstance(n, int) and n >= 1:
                return n
    except Exception:
        pass
    try:
        n = getattr(jax.devices()[0], "num_cores", None)
        if isinstance(n, int) and n >= 1:
            return n
    except Exception:
        pass
    return 1


def dqn_kernel(x_ref, w1_ref, b1_ref, w2_ref, b2_ref, w3_ref, b3_ref, o_ref):
    # x tile -> matmul dtype happens here (no extra HBM pass in the wrapper).
    x = x_ref[...].astype(w1_ref.dtype)                                   # (TB, Din)

    h1 = jnp.dot(x, w1_ref[...], preferred_element_type=jnp.float32)     # (TB, 128) f32
    h1 = jnp.maximum(h1 + b1_ref[...], 0.0)

    h2 = jnp.dot(h1.astype(w2_ref.dtype), w2_ref[...],
                 preferred_element_type=jnp.float32)                      # (TB, 128) f32
    h2 = jnp.maximum(h2 + b2_ref[...], 0.0)

    out = jnp.dot(h2.astype(w3_ref.dtype), w3_ref[...],
                  preferred_element_type=jnp.float32)                     # (TB, Dout) f32
    o_ref[...] = (out + b3_ref[...]).astype(o_ref.dtype)


def prepare_params(w1, b1, w2, b2, w3, b3, *, use_bf16=False):
    """One-time param prep (hoisted out of the per-call hot path).

    Weights: (in_features, out_features), cast to the matmul operand dtype.
    Biases:  reshaped to (1, out_features) f32 (accepts PyTorch-style (out,)).
    """
    mm = jnp.bfloat16 if use_bf16 else jnp.float32
    as_b = lambda b: jnp.asarray(b, jnp.float32).reshape(1, -1)
    return (jnp.asarray(w1, mm), as_b(b1),
            jnp.asarray(w2, mm), as_b(b2),
            jnp.asarray(w3, mm), as_b(b3))


@functools.partial(jax.jit,
                   static_argnames=("block_b", "num_tensorcores", "out_dtype"))
def dqn_forward(x, w1, b1, w2, b2, w3, b3, *, block_b=2048,
                num_tensorcores=1, out_dtype=None):
    """y = ReLU(x@w1+b1) @ w2 ... ; params must come from prepare_params()."""
    B, din = x.shape
    dout = w3.shape[1]
    if out_dtype is None:
        out_dtype = x.dtype

    # --- batch tile: big by default; split across TCs only on multi-TC chips.
    tb = min(block_b, _round_up(B, 8))
    if num_tensorcores >= 2 and B > 8:
        tb = min(tb, _round_up(pl.cdiv(B, num_tensorcores), 8))
    tb = max(8, _round_up(tb, 8))
    grid = (pl.cdiv(B, tb),)

    rep = lambda shape: pl.BlockSpec(shape, lambda i: (0, 0))  # VMEM-resident

    return pl.pallas_call(
        dqn_kernel,
        out_shape=jax.ShapeDtypeStruct((B, dout), out_dtype),
        grid_spec=pltpu.PrefetchScalarGridSpec(
            num_scalar_prefetch=0,
            grid=grid,
            in_specs=[
                pl.BlockSpec((tb, din), lambda i: (i, 0)),  # x tile (unpadded)
                rep((din, HIDDEN)),                         # w1
                rep((1, HIDDEN)),                           # b1 (f32)
                rep((HIDDEN, HIDDEN)),                      # w2
                rep((1, HIDDEN)),                           # b2 (f32)
                rep((HIDDEN, dout)),                        # w3
                rep((1, dout)),                             # b3 (f32)
            ],
            out_specs=pl.BlockSpec((tb, dout), lambda i: (i, 0)),
        ),
        compiler_params=pltpu.CompilerParams(
            dimension_semantics=("parallel",)),
    )(x, w1, b1, w2, b2, w3, b3)


def init_params(key, input_dim, output_dim):
    """Deterministic synthetic init (PyTorch-style uniform fan-in scaling)."""
    ks = jax.random.split(key, 6)

    def lin(kw, kb, fan_in, fan_out):
        bound = 1.0 / jnp.sqrt(fan_in)
        w = jax.random.uniform(kw, (fan_in, fan_out), jnp.float32, -bound, bound)
        b = jax.random.uniform(kb, (fan_out,), jnp.float32, -bound, bound)
        return w, b

    w1, b1 = lin(ks[0], ks[1], input_dim, HIDDEN)
    w2, b2 = lin(ks[2], ks[3], HIDDEN, HIDDEN)
    w3, b3 = lin(ks[4], ks[5], HIDDEN, output_dim)
    return w1, b1, w2, b2, w3, b3


def dqn_reference(x, w1, b1, w2, b2, w3, b3, *, use_bf16=False):
    mm = jnp.bfloat16 if use_bf16 else jnp.float32
    b1 = b1.reshape(1, -1); b2 = b2.reshape(1, -1); b3 = b3.reshape(1, -1)
    h1 = jnp.maximum(
        jnp.dot(x.astype(mm), w1.astype(mm),
                preferred_element_type=jnp.float32) + b1, 0.0)
    h2 = jnp.maximum(
        jnp.dot(h1.astype(mm), w2.astype(mm),
                preferred_element_type=jnp.float32) + b2, 0.0)
    return jnp.dot(h2.astype(mm), w3.astype(mm),
                   preferred_element_type=jnp.float32) + b3


if __name__ == "__main__":
    input_dim, output_dim, batch = 32, 8, 64
    num_tc = detect_num_tensorcores()

    key = jax.random.PRNGKey(0)
    kx, kp = jax.random.split(key)
    x = jax.random.normal(kx, (batch, input_dim), jnp.float32)
    raw_params = init_params(kp, input_dim, output_dim)

    # 1) f32 path (default precision): exact check against the f32 reference.
    p_f32 = prepare_params(*raw_params, use_bf16=False)
    out_f32 = jax.block_until_ready(
        dqn_forward(x, *p_f32, num_tensorcores=num_tc))
    ref_f32 = dqn_reference(x, *raw_params, use_bf16=False)
    assert out_f32.shape == (batch, output_dim)
    assert jnp.allclose(out_f32, ref_f32, atol=1e-5, rtol=1e-5), \
        float(jnp.max(jnp.abs(out_f32 - ref_f32)))

    # 2) Opt-in bf16 matmul operands (f32 accumulation) vs bf16 reference.
    p_bf16 = prepare_params(*raw_params, use_bf16=True)
    out_bf16 = jax.block_until_ready(
        dqn_forward(x, *p_bf16, num_tensorcores=num_tc))
    ref_bf16 = dqn_reference(x, *raw_params, use_bf16=True)
    assert out_bf16.shape == (batch, output_dim)
    assert jnp.allclose(out_bf16, ref_bf16, atol=2e-2, rtol=2e-2), \
        float(jnp.max(jnp.abs(out_bf16 - ref_bf16)))

    # 3) Edge-tile / multi-step-grid check: B not divisible by the tile, with
    #    a tiny block to force several grid steps and a ragged last tile.
    B2 = 50
    x2 = jax.random.normal(jax.random.PRNGKey(1), (B2, input_dim), jnp.float32)
    out_edge = jax.block_until_ready(
        dqn_forward(x2, *p_f32, block_b=16, num_tensorcores=2))
    ref_edge = dqn_reference(x2, *raw_params, use_bf16=False)
    assert out_edge.shape == (B2, output_dim)
    assert jnp.allclose(out_edge, ref_edge, atol=1e-5, rtol=1e-5), \
        float(jnp.max(jnp.abs(out_edge - ref_edge)))

    print("KERNEL_OK")
</pallas_src>

<mosaic_0001>
module attributes {stable_mosaic.version = 11 : i64} {
  func.func @dqn_kernel(%arg0: i32, %arg1: memref<64x32xf32, #tpu.memory_space<vmem>>, %arg2: memref<32x128xf32, #tpu.memory_space<vmem>>, %arg3: memref<1x128xf32, #tpu.memory_space<vmem>>, %arg4: memref<128x128xf32, #tpu.memory_space<vmem>>, %arg5: memref<1x128xf32, #tpu.memory_space<vmem>>, %arg6: memref<128x8xf32, #tpu.memory_space<vmem>>, %arg7: memref<1x8xf32, #tpu.memory_space<vmem>>, %arg8: memref<64x8xf32, #tpu.memory_space<vmem>>) attributes {dimension_semantics = [#tpu.dimension_semantics<parallel>], iteration_bounds = array<i64: 1>, scalar_prefetch = 0 : i64, scratch_operands = 0 : i64, tpu.core_type = #tpu.core_type<tc>, window_params = [{transform_indices = @transform_0, window_bounds = array<i64: 64, 32>}, {pipeline_mode = #tpu.pipeline_mode<synchronous>, transform_indices = @transform_1, window_bounds = array<i64: 32, 128>}, {pipeline_mode = #tpu.pipeline_mode<synchronous>, transform_indices = @transform_2, window_bounds = array<i64: 1, 128>}, {pipeline_mode = #tpu.pipeline_mode<synchronous>, transform_indices = @transform_3, window_bounds = array<i64: 128, 128>}, {pipeline_mode = #tpu.pipeline_mode<synchronous>, transform_indices = @transform_4, window_bounds = array<i64: 1, 128>}, {pipeline_mode = #tpu.pipeline_mode<synchronous>, transform_indices = @transform_5, window_bounds = array<i64: 128, 8>}, {pipeline_mode = #tpu.pipeline_mode<synchronous>, transform_indices = @transform_6, window_bounds = array<i64: 1, 8>}, {transform_indices = @transform_7, window_bounds = array<i64: 64, 8>}]} {
    %c0 = arith.constant 0 : index
    %c0_0 = arith.constant 0 : index
    %0 = vector.load %arg1[%c0, %c0_0] : memref<64x32xf32, #tpu.memory_space<vmem>>, vector<64x32xf32>
    %c0_1 = arith.constant 0 : index
    %c0_2 = arith.constant 0 : index
    %1 = vector.load %arg2[%c0_1, %c0_2] : memref<32x128xf32, #tpu.memory_space<vmem>>, vector<32x128xf32>
    %cst = arith.constant dense<0.000000e+00> : vector<64x128xf32>
    %2 = tpu.matmul %0, %1, %cst {dimension_numbers = #tpu.dot_dimension_numbers<[1], [0], [0], [1], [0, 0, 1, 1], [], []>} : vector<64x32xf32>, vector<32x128xf32>, vector<64x128xf32> -> vector<64x128xf32>
    %c0_3 = arith.constant 0 : index
    %c0_4 = arith.constant 0 : index
    %3 = vector.load %arg3[%c0_3, %c0_4] : memref<1x128xf32, #tpu.memory_space<vmem>>, vector<1x128xf32>
    %4 = vector.broadcast %3 : vector<1x128xf32> to vector<64x128xf32>
    %5 = arith.addf %2, %4 : vector<64x128xf32>
    %cst_5 = arith.constant 0.000000e+00 : f32
    %6 = vector.broadcast %cst_5 : f32 to vector<64x128xf32>
    %7 = arith.maximumf %5, %6 : vector<64x128xf32>
    %c0_6 = arith.constant 0 : index
    %c0_7 = arith.constant 0 : index
    %8 = vector.load %arg4[%c0_6, %c0_7] : memref<128x128xf32, #tpu.memory_space<vmem>>, vector<128x128xf32>
    %cst_8 = arith.constant dense<0.000000e+00> : vector<64x128xf32>
    %9 = tpu.matmul %7, %8, %cst_8 {dimension_numbers = #tpu.dot_dimension_numbers<[1], [0], [0], [1], [0, 0, 1, 1], [], []>} : vector<64x128xf32>, vector<128x128xf32>, vector<64x128xf32> -> vector<64x128xf32>
    %c0_9 = arith.constant 0 : index
    %c0_10 = arith.constant 0 : index
    %10 = vector.load %arg5[%c0_9, %c0_10] : memref<1x128xf32, #tpu.memory_space<vmem>>, vector<1x128xf32>
    %11 = vector.broadcast %10 : vector<1x128xf32> to vector<64x128xf32>
    %12 = arith.addf %9, %11 : vector<64x128xf32>
    %cst_11 = arith.constant 0.000000e+00 : f32
    %13 = vector.broadcast %cst_11 : f32 to vector<64x128xf32>
    %14 = arith.maximumf %12, %13 : vector<64x128xf32>
    %c0_12 = arith.constant 0 : index
    %c0_13 = arith.constant 0 : index
    %15 = vector.load %arg6[%c0_12, %c0_13] : memref<128x8xf32, #tpu.memory_space<vmem>>, vector<128x8xf32>
    %cst_14 = arith.constant dense<0.000000e+00> : vector<64x8xf32>
    %16 = tpu.matmul %14, %15, %cst_14 {dimension_numbers = #tpu.dot_dimension_numbers<[1], [0], [0], [1], [0, 0, 1, 1], [], []>} : vector<64x128xf32>, vector<128x8xf32>, vector<64x8xf32> -> vector<64x8xf32>
    %c0_15 = arith.constant 0 : index
    %c0_16 = arith.constant 0 : index
    %17 = vector.load %arg7[%c0_15, %c0_16] : memref<1x8xf32, #tpu.memory_space<vmem>>, vector<1x8xf32>
    %18 = vector.broadcast %17 : vector<1x8xf32> to vector<64x8xf32>
    %19 = arith.addf %16, %18 : vector<64x8xf32>
    %c0_17 = arith.constant 0 : index
    %c0_18 = arith.constant 0 : index
    %20 = vector.load %arg8[%c0_17, %c0_18] : memref<64x8xf32, #tpu.memory_space<vmem>>, vector<64x8xf32>
    tpu.vector_store %arg8[%c0_17, %c0_18], %19 {strides = array<i32>} : memref<64x8xf32, #tpu.memory_space<vmem>>, vector<64x8xf32>,
    return
  }
  func.func @transform_0(%arg0: i32) -> (i32, i32) {
    %c0_i32 = arith.constant 0 : i32
    %c0_i32_0 = arith.constant 0 : i32
    return %arg0, %c0_i32 : i32, i32
  }
  func.func @transform_1(%arg0: i32) -> (i32, i32) {
    %c0_i32 = arith.constant 0 : i32
    %c0_i32_0 = arith.constant 0 : i32
    %c0_i32_1 = arith.constant 0 : i32
    return %c0_i32, %c0_i32_0 : i32, i32
  }
  func.func @transform_2(%arg0: i32) -> (i32, i32) {
    %c0_i32 = arith.constant 0 : i32
    %c0_i32_0 = arith.constant 0 : i32
    %c0_i32_1 = arith.constant 0 : i32
    return %c0_i32, %c0_i32_0 : i32, i32
  }
  func.func @transform_3(%arg0: i32) -> (i32, i32) {
    %c0_i32 = arith.constant 0 : i32
    %c0_i32_0 = arith.constant 0 : i32
    %c0_i32_1 = arith.constant 0 : i32
    return %c0_i32, %c0_i32_0 : i32, i32
  }
  func.func @transform_4(%arg0: i32) -> (i32, i32) {
    %c0_i32 = arith.constant 0 : i32
    %c0_i32_0 = arith.constant 0 : i32
    %c0_i32_1 = arith.constant 0 : i32
    return %c0_i32, %c0_i32_0 : i32, i32
  }
  func.func @transform_5(%arg0: i32) -> (i32, i32) {
    %c0_i32 = arith.constant 0 : i32
    %c0_i32_0 = arith.constant 0 : i32
    %c0_i32_1 = arith.constant 0 : i32
    return %c0_i32, %c0_i32_0 : i32, i32
  }
  func.func @transform_6(%arg0: i32) -> (i32, i32) {
    %c0_i32 = arith.constant 0 : i32
    %c0_i32_0 = arith.constant 0 : i32
    %c0_i32_1 = arith.constant 0 : i32
    return %c0_i32, %c0_i32_0 : i32, i32
  }
  func.func @transform_7(%arg0: i32) -> (i32, i32) {
    %c0_i32 = arith.constant 0 : i32
    %c0_i32_0 = arith.constant 0 : i32
    return %arg0, %c0_i32 : i32, i32
  }
}

</mosaic_0001>

<llo_original>
// kernel: dqn_forward.1
$region0: #{dqn_forward.1}
  #allocation0 [shape = 'u32[]', space=smem, size = 0x4, offset = 0x4, fixed_abs, tag = 'smem constant byte address 0x4 - core index']
  #allocation1 [shape = 'u32[144,128]{1,0:T(1,128)}', space=vmem, size = 0x12000, scoped, tag = 'internal scratch']
  %s0 = inlined_call_operand.vmem [shape: f32[64,32], index: 0, kind: input, shape index: {}]
  %s1 = inlined_call_operand.vmem [shape: f32[32,128], index: 1, kind: input, shape index: {}]
  %s2 = inlined_call_operand.vmem [shape: f32[1,128], index: 2, kind: input, shape index: {}]
  %s3 = inlined_call_operand.vmem [shape: f32[128,128], index: 3, kind: input, shape index: {}]
  %s4 = inlined_call_operand.vmem [shape: f32[1,128], index: 4, kind: input, shape index: {}]
  %s5 = inlined_call_operand.vmem [shape: f32[128,8], index: 5, kind: input, shape index: {}]
  %s6 = inlined_call_operand.vmem [shape: f32[1,8], index: 6, kind: input, shape index: {}]
  %s7 = inlined_call_operand.vmem [shape: f32[64,8], index: 7, kind: output, shape index: {}]
  %s8 = sld [smem:[#allocation0]]
  $region38: #{dqn_forward.1} parent=0
    _
  %s10 = ssub.s32 1, %s8
  %s11 = scalar_select 0, %s10, %s8
  // Predicated region
  $region2: #{dqn_forward.1} parent=0 // pred_check
    _
  $region3: #{dqn_forward.1} parent=0 // pred_check_branch
    %13 = sbr.rel (0) target = $region5
  $region4: #{dqn_forward.1} parent=0 // pred_region
    _
  $region5: #{dqn_forward.1} parent=0 // pred_fallthru
    _
  // Predicated region
  $region6: #{dqn_forward.1} parent=0 // pred_check
    _
  $region7: #{dqn_forward.1} parent=0 // pred_check_branch
    %15 = sbr.rel (0) target = $region9
  $region8: #{dqn_forward.1} parent=0 // pred_region
    _
  $region9: #{dqn_forward.1} parent=0 // pred_fallthru
    _
  // Predicated region
  $region10: #{dqn_forward.1} parent=0 // pred_check
    _
  $region11: #{dqn_forward.1} parent=0 // pred_check_branch
    %17 = sbr.rel (0) target = $region13
  $region12: #{dqn_forward.1} parent=0 // pred_region
    _
  $region13: #{dqn_forward.1} parent=0 // pred_fallthru
    _
  // Predicated region
  $region14: #{dqn_forward.1} parent=0 // pred_check
    _
  $region15: #{dqn_forward.1} parent=0 // pred_check_branch
    %19 = sbr.rel (0) target = $region17
  $region16: #{dqn_forward.1} parent=0 // pred_region
    _
  $region17: #{dqn_forward.1} parent=0 // pred_fallthru
    _
  // Predicated region
  $region18: #{dqn_forward.1} parent=0 // pred_check
    _
  $region19: #{dqn_forward.1} parent=0 // pred_check_branch
    %21 = sbr.rel (0) target = $region21
  $region20: #{dqn_forward.1} parent=0 // pred_region
    _
  $region21: #{dqn_forward.1} parent=0 // pred_fallthru
    _
  // Predicated region
  $region22: #{dqn_forward.1} parent=0 // pred_check
    _
  $region23: #{dqn_forward.1} parent=0 // pred_check_branch
    %23 = sbr.rel (0) target = $region25
  $region24: #{dqn_forward.1} parent=0 // pred_region
    _
  $region25: #{dqn_forward.1} parent=0 // pred_fallthru
    _
  // Predicated region
  $region26: #{dqn_forward.1} parent=0 // pred_check
    _
  $region27: #{dqn_forward.1} parent=0 // pred_check_branch
    %25 = sbr.rel (0) target = $region29
  $region28: #{dqn_forward.1} parent=0 // pred_region
    _
  $region29: #{dqn_forward.1} parent=0 // pred_fallthru
    _
  %v26 = vld [vmem:[%s0] sm:$0xff]
  %v27 = vld [vmem:[%s0 + $0x8] sm:$0xff]
  %v28 = vld [vmem:[%s0 + $0x10] sm:$0xff]
  %v29 = vld [vmem:[%s0 + $0x18] sm:$0xff]
  %v30 = vld [vmem:[%s0 + $0x20] sm:$0xff]
  %v31 = vld [vmem:[%s0 + $0x28] sm:$0xff]
  %v32 = vld [vmem:[%s0 + $0x30] sm:$0xff]
  %v33 = vld [vmem:[%s0 + $0x38] sm:$0xff]
  %v34 = vld [vmem:[%s1] sm:$0xff]
  %v35 = vld [vmem:[%s1 + $0x8] sm:$0xff]
  %v36 = vld [vmem:[%s1 + $0x10] sm:$0xff]
  %v37 = vld [vmem:[%s1 + $0x18] sm:$0xff]
  %v38 = vld [vmem:[%s2] sm:$0x1]
  %v40 = vlaneseq
  %v41 = vshrl.u32 %v40, 7
  %v42 = vsub.s32 0, %v41
  %v43 = vrot.slane %v38, %v42
  %vm45 = vcmask 261120
  %v47 = vsel %vm45, %v26, 0
  %v50 = vsel %vm45, %v27, 0
  %v53 = vsel %vm45, %v28, 0
  %v56 = vsel %vm45, %v29, 0
  %v59 = vsel %vm45, %v30, 0
  %v62 = vsel %vm45, %v31, 0
  %v65 = vsel %vm45, %v32, 0
  %v68 = vsel %vm45, %v33, 0
  %70 = vmatprep.subr.mxu0 0.0
  %71 = vmatpush1.msra.mxu0 %v34
  %72 = vmatprep.subr.mxu0 0.0
  %73 = vmatpush1.msra.mxu0 %v35
  %74 = vmatprep.subr.mxu0 0.0
  %75 = vmatpush1.msra.mxu0 %v36
  %76 = vmatprep.subr.mxu0 0.0
  %77 = vmatpush1.msra.mxu0 %v37
  %78 = vmatprep.subr.mxu0 0.0
  %79 = vmatpush1.msra.mxu0 0.0
  %80 = vmatprep.subr.mxu0 0.0
  %81 = vmatpush1.msra.mxu0 0.0
  %82 = vmatprep.subr.mxu0 0.0
  %83 = vmatpush1.msra.mxu0 0.0
  %84 = vmatprep.subr.mxu0 0.0
  %85 = vmatpush1.msra.mxu0 0.0
  %86 = vmatprep.subr.mxu0 0.0
  %87 = vmatpush1.msra.mxu0 0.0
  %88 = vmatprep.subr.mxu0 0.0
  %89 = vmatpush1.msra.mxu0 0.0
  %90 = vmatprep.subr.mxu0 0.0
  %91 = vmatpush1.msra.mxu0 0.0
  %92 = vmatprep.subr.mxu0 0.0
  %93 = vmatpush1.msra.mxu0 0.0
  %94 = vmatprep.subr.mxu0 0.0
  %95 = vmatpush1.msra.mxu0 0.0
  %96 = vmatprep.subr.mxu0 0.0
  %97 = vmatpush1.msra.mxu0 0.0
  %98 = vmatprep.subr.mxu0 0.0
  %99 = vmatpush1.msra.mxu0 0.0
  %100 = vmatprep.subr.mxu0 0.0
  %101 = vmatpush1.msra.mxu0 0.0
  %102 = vmatprep.subr.mxu0 0.0
  %103 = vmatpush1.msra.mxu0 0.0
  %104 = vmatprep.subr.mxu0 0.0
  %105 = vmatpush1.msra.mxu0 0.0
  %106 = vmatprep.subr.mxu0 0.0
  %107 = vmatpush1.msra.mxu0 0.0
  %108 = vmatprep.subr.mxu0 0.0
  %109 = vmatpush1.msra.mxu0 0.0
  %110 = vmatprep.subr.mxu0 0.0
  %111 = vmatpush1.msra.mxu0 0.0
  %112 = vmatprep.subr.mxu0 0.0
  %113 = vmatpush1.msra.mxu0 0.0
  %114 = vmatprep.subr.mxu0 0.0
  %115 = vmatpush1.msra.mxu0 0.0
  %116 = vmatprep.subr.mxu0 0.0
  %117 = vmatpush1.msra.mxu0 0.0
  %118 = vmatprep.subr.mxu0 0.0
  %119 = vmatpush1.msra.mxu0 0.0
  %120 = vmatprep.subr.mxu0 0.0
  %121 = vmatpush1.msra.mxu0 0.0
  %122 = vmatprep.subr.mxu0 0.0
  %123 = vmatpush1.msra.mxu0 0.0
  %124 = vmatprep.subr.mxu0 0.0
  %125 = vmatpush1.msra.mxu0 0.0
  %126 = vmatprep.subr.mxu0 0.0
  %127 = vmatpush1.msra.mxu0 0.0
  %128 = vmatprep.subr.mxu0 0.0
  %129 = vmatpush1.msra.mxu0 0.0
  %130 = vmatprep.subr.mxu0 0.0
  %131 = vmatpush1.msra.mxu0 0.0
  %132 = vmatprep.subr.mxu0 0.0
  %133 = vmatpush1.msra.mxu0 0.0
  %134 = vmatprep.mubr.f32.mxu0 0.0
  %135 = vmatmul.mubr.f32.gmra.mrb[0].mxu0 %v47
  %v136 = vpop.f32.mrb[0].mxu0
  %v137 = vadd.f32 %v43, %v136
  %v138 = vpop.f32.mrb[0].mxu0
  %139 = vmatprep.mubr.f32.mxu0 0.0
  %140 = vmatmul.mubr.f32.gmra.mrb[0].mxu0 %v50
  %v141 = vpop.f32.mrb[0].mxu0
  %v142 = vadd.f32 %v43, %v141
  %v143 = vpop.f32.mrb[0].mxu0
  %144 = vmatprep.mubr.f32.mxu0 0.0
  %145 = vmatmul.mubr.f32.gmra.mrb[0].mxu0 %v53
  %v146 = vpop.f32.mrb[0].mxu0
  %v147 = vadd.f32 %v43, %v146
  %v148 = vpop.f32.mrb[0].mxu0
  %149 = vmatprep.mubr.f32.mxu0 0.0
  %150 = vmatmul.mubr.f32.gmra.mrb[0].mxu0 %v56
  %v151 = vpop.f32.mrb[0].mxu0
  %v152 = vadd.f32 %v43, %v151
  %v153 = vpop.f32.mrb[0].mxu0
  %154 = vmatprep.mubr.f32.mxu0 0.0
  %155 = vmatmul.mubr.f32.gmra.mrb[0].mxu0 %v59
  %v156 = vpop.f32.mrb[0].mxu0
  %v157 = vadd.f32 %v43, %v156
  %v158 = vpop.f32.mrb[0].mxu0
  %159 = vmatprep.mubr.f32.mxu0 0.0
  %160 = vmatmul.mubr.f32.gmra.mrb[0].mxu0 %v62
  %v161 = vpop.f32.mrb[0].mxu0
  %v162 = vadd.f32 %v43, %v161
  %v163 = vpop.f32.mrb[0].mxu0
  %164 = vmatprep.mubr.f32.mxu0 0.0
  %165 = vmatmul.mubr.f32.gmra.mrb[0].mxu0 %v65
  %v166 = vpop.f32.mrb[0].mxu0
  %v167 = vadd.f32 %v43, %v166
  %v168 = vpop.f32.mrb[0].mxu0
  %169 = vmatprep.mubr.f32.mxu0 0.0
  %170 = vmatmul.mubr.f32.gmra.mrb[0].mxu0 %v68
  %v171 = vpop.f32.mrb[0].mxu0
  %v172 = vadd.f32 %v43, %v171
  %v173 = vpop.f32.mrb[0].mxu0
  %174 = vdwg.mxu0
  %v175 = vmax.f32 %v137, 0.0
  %v176 = vmax.f32 %v142, 0.0
  %v177 = vmax.f32 %v147, 0.0
  %v178 = vmax.f32 %v152, 0.0
  %v179 = vmax.f32 %v157, 0.0
  %v180 = vmax.f32 %v162, 0.0
  %v181 = vmax.f32 %v167, 0.0
  %v182 = vmax.f32 %v172, 0.0
  %v183 = vld [vmem:[%s3] sm:$0xff]
  %v184 = vld [vmem:[%s3 + $0x8] sm:$0xff]
  %v185 = vld [vmem:[%s3 + $0x10] sm:$0xff]
  %v186 = vld [vmem:[%s3 + $0x18] sm:$0xff]
  %v187 = vld [vmem:[%s3 + $0x20] sm:$0xff]
  %v188 = vld [vmem:[%s3 + $0x28] sm:$0xff]
  %v189 = vld [vmem:[%s3 + $0x30] sm:$0xff]
  %v190 = vld [vmem:[%s3 + $0x38] sm:$0xff]
  %v191 = vld [vmem:[%s3 + $0x40] sm:$0xff]
  %v192 = vld [vmem:[%s3 + $0x48] sm:$0xff]
  %v193 = vld [vmem:[%s3 + $0x50] sm:$0xff]
  %v194 = vld [vmem:[%s3 + $0x58] sm:$0xff]
  %v195 = vld [vmem:[%s3 + $0x60] sm:$0xff]
  %v196 = vld [vmem:[%s3 + $0x68] sm:$0xff]
  %v197 = vld [vmem:[%s3 + $0x70] sm:$0xff]
  %v198 = vld [vmem:[%s3 + $0x78] sm:$0xff]
  %v199 = vld [vmem:[%s4] sm:$0x1]
  %v201 = vlaneseq
  %v202 = vshrl.u32 %v201, 7
  %v203 = vsub.s32 0, %v202
  %v204 = vrot.slane %v199, %v203
  %206 = vmatprep.subr.mxu0 0.0
  %207 = vmatpush1.msra.mxu0 %v183
  %208 = vmatprep.subr.mxu0 0.0
  %209 = vmatpush1.msra.mxu0 %v184
  %210 = vmatprep.subr.mxu0 0.0
  %211 = vmatpush1.msra.mxu0 %v185
  %212 = vmatprep.subr.mxu0 0.0
  %213 = vmatpush1.msra.mxu0 %v186
  %214 = vmatprep.subr.mxu0 0.0
  %215 = vmatpush1.msra.mxu0 %v187
  %216 = vmatprep.subr.mxu0 0.0
  %217 = vmatpush1.msra.mxu0 %v188
  %218 = vmatprep.subr.mxu0 0.0
  %219 = vmatpush1.msra.mxu0 %v189
  %220 = vmatprep.subr.mxu0 0.0
  %221 = vmatpush1.msra.mxu0 %v190
  %222 = vmatprep.subr.mxu0 0.0
  %223 = vmatpush1.msra.mxu0 %v191
  %224 = vmatprep.subr.mxu0 0.0
  %225 = vmatpush1.msra.mxu0 %v192
  %226 = vmatprep.subr.mxu0 0.0
  %227 = vmatpush1.msra.mxu0 %v193
  %228 = vmatprep.subr.mxu0 0.0
  %229 = vmatpush1.msra.mxu0 %v194
  %230 = vmatprep.subr.mxu0 0.0
  %231 = vmatpush1.msra.mxu0 %v195
  %232 = vmatprep.subr.mxu0 0.0
  %233 = vmatpush1.msra.mxu0 %v196
  %234 = vmatprep.subr.mxu0 0.0
  %235 = vmatpush1.msra.mxu0 %v197
  %236 = vmatprep.subr.mxu0 0.0
  %237 = vmatpush1.msra.mxu0 %v198
  %238 = vmatprep.subr.mxu0 0.0
  %239 = vmatpush1.msra.mxu0 0.0
  %240 = vmatprep.subr.mxu0 0.0
  %241 = vmatpush1.msra.mxu0 0.0
  %242 = vmatprep.subr.mxu0 0.0
  %243 = vmatpush1.msra.mxu0 0.0
  %244 = vmatprep.subr.mxu0 0.0
  %245 = vmatpush1.msra.mxu0 0.0
  %246 = vmatprep.subr.mxu0 0.0
  %247 = vmatpush1.msra.mxu0 0.0
  %248 = vmatprep.subr.mxu0 0.0
  %249 = vmatpush1.msra.mxu0 0.0
  %250 = vmatprep.subr.mxu0 0.0
  %251 = vmatpush1.msra.mxu0 0.0
  %252 = vmatprep.subr.mxu0 0.0
  %253 = vmatpush1.msra.mxu0 0.0
  %254 = vmatprep.subr.mxu0 0.0
  %255 = vmatpush1.msra.mxu0 0.0
  %256 = vmatprep.subr.mxu0 0.0
  %257 = vmatpush1.msra.mxu0 0.0
  %258 = vmatprep.subr.mxu0 0.0
  %259 = vmatpush1.msra.mxu0 0.0
  %260 = vmatprep.subr.mxu0 0.0
  %261 = vmatpush1.msra.mxu0 0.0
  %262 = vmatprep.subr.mxu0 0.0
  %263 = vmatpush1.msra.mxu0 0.0
  %264 = vmatprep.subr.mxu0 0.0
  %265 = vmatpush1.msra.mxu0 0.0
  %266 = vmatprep.subr.mxu0 0.0
  %267 = vmatpush1.msra.mxu0 0.0
  %268 = vmatprep.subr.mxu0 0.0
  %269 = vmatpush1.msra.mxu0 0.0
  %270 = vmatprep.mubr.f32.mxu0 0.0
  %271 = vmatmul.mubr.f32.gmra.mrb[0].mxu0 %v175
  %v272 = vpop.f32.mrb[0].mxu0
  %v273 = vadd.f32 %v204, %v272
  %v274 = vpop.f32.mrb[0].mxu0
  %275 = vmatprep.mubr.f32.mxu0 0.0
  %276 = vmatmul.mubr.f32.gmra.mrb[0].mxu0 %v176
  %v277 = vpop.f32.mrb[0].mxu0
  %v278 = vadd.f32 %v204, %v277
  %v279 = vpop.f32.mrb[0].mxu0
  %280 = vmatprep.mubr.f32.mxu0 0.0
  %281 = vmatmul.mubr.f32.gmra.mrb[0].mxu0 %v177
  %v282 = vpop.f32.mrb[0].mxu0
  %v283 = vadd.f32 %v204, %v282
  %v284 = vpop.f32.mrb[0].mxu0
  %285 = vmatprep.mubr.f32.mxu0 0.0
  %286 = vmatmul.mubr.f32.gmra.mrb[0].mxu0 %v178
  %v287 = vpop.f32.mrb[0].mxu0
  %v288 = vadd.f32 %v204, %v287
  %v289 = vpop.f32.mrb[0].mxu0
  %290 = vmatprep.mubr.f32.mxu0 0.0
  %291 = vmatmul.mubr.f32.gmra.mrb[0].mxu0 %v179
  %v292 = vpop.f32.mrb[0].mxu0
  %v293 = vadd.f32 %v204, %v292
  %v294 = vpop.f32.mrb[0].mxu0
  %295 = vmatprep.mubr.f32.mxu0 0.0
  %296 = vmatmul.mubr.f32.gmra.mrb[0].mxu0 %v180
  %v297 = vpop.f32.mrb[0].mxu0
  %v298 = vadd.f32 %v204, %v297
  %v299 = vpop.f32.mrb[0].mxu0
  %300 = vmatprep.mubr.f32.mxu0 0.0
  %301 = vmatmul.mubr.f32.gmra.mrb[0].mxu0 %v181
  %v302 = vpop.f32.mrb[0].mxu0
  %v303 = vadd.f32 %v204, %v302
  %v304 = vpop.f32.mrb[0].mxu0
  %305 = vmatprep.mubr.f32.mxu0 0.0
  %306 = vmatmul.mubr.f32.gmra.mrb[0].mxu0 %v182
  %v307 = vpop.f32.mrb[0].mxu0
  %v308 = vadd.f32 %v204, %v307
  %v309 = vpop.f32.mrb[0].mxu0
  %310 = vdwg.mxu0
  %v311 = vmax.f32 %v273, 0.0
  %v312 = vmax.f32 %v278, 0.0
  %v313 = vmax.f32 %v283, 0.0
  %v314 = vmax.f32 %v288, 0.0
  %v315 = vmax.f32 %v293, 0.0
  %v316 = vmax.f32 %v298, 0.0
  %v317 = vmax.f32 %v303, 0.0
  %v318 = vmax.f32 %v308, 0.0
  %v319 = vld [vmem:[%s5] sm:$0xff]
  %v320 = vld [vmem:[%s5 + $0x8] sm:$0xff]
  %v321 = vld [vmem:[%s5 + $0x10] sm:$0xff]
  %v322 = vld [vmem:[%s5 + $0x18] sm:$0xff]
  %v323 = vld [vmem:[%s5 + $0x20] sm:$0xff]
  %v324 = vld [vmem:[%s5 + $0x28] sm:$0xff]
  %v325 = vld [vmem:[%s5 + $0x30] sm:$0xff]
  %v326 = vld [vmem:[%s5 + $0x38] sm:$0xff]
  %v327 = vld [vmem:[%s5 + $0x40] sm:$0xff]
  %v328 = vld [vmem:[%s5 + $0x48] sm:$0xff]
  %v329 = vld [vmem:[%s5 + $0x50] sm:$0xff]
  %v330 = vld [vmem:[%s5 + $0x58] sm:$0xff]
  %v331 = vld [vmem:[%s5 + $0x60] sm:$0xff]
  %v332 = vld [vmem:[%s5 + $0x68] sm:$0xff]
  %v333 = vld [vmem:[%s5 + $0x70] sm:$0xff]
  %v334 = vld [vmem:[%s5 + $0x78] sm:$0xff]
  %v335 = vld [vmem:[%s6] sm:$0x1]
  %v337 = vlaneseq
  %v338 = vshrl.u32 %v337, 7
  %v339 = vsub.s32 0, %v338
  %v340 = vrot.slane %v335, %v339
  %342 = vmatprep.subr.mxu0 0.0
  %343 = vmatpush1.msra.mxu0 %v319
  %344 = vmatprep.subr.mxu0 0.0
  %345 = vmatpush1.msra.mxu0 %v320
  %346 = vmatprep.subr.mxu0 0.0
  %347 = vmatpush1.msra.mxu0 %v321
  %348 = vmatprep.subr.mxu0 0.0
  %349 = vmatpush1.msra.mxu0 %v322
  %350 = vmatprep.subr.mxu0 0.0
  %351 = vmatpush1.msra.mxu0 %v323
  %352 = vmatprep.subr.mxu0 0.0
  %353 = vmatpush1.msra.mxu0 %v324
  %354 = vmatprep.subr.mxu0 0.0
  %355 = vmatpush1.msra.mxu0 %v325
  %356 = vmatprep.subr.mxu0 0.0
  %357 = vmatpush1.msra.mxu0 %v326
  %358 = vmatprep.subr.mxu0 0.0
  %359 = vmatpush1.msra.mxu0 %v327
  %360 = vmatprep.subr.mxu0 0.0
  %361 = vmatpush1.msra.mxu0 %v328
  %362 = vmatprep.subr.mxu0 0.0
  %363 = vmatpush1.msra.mxu0 %v329
  %364 = vmatprep.subr.mxu0 0.0
  %365 = vmatpush1.msra.mxu0 %v330
  %366 = vmatprep.subr.mxu0 0.0
  %367 = vmatpush1.msra.mxu0 %v331
  %368 = vmatprep.subr.mxu0 0.0
  %369 = vmatpush1.msra.mxu0 %v332
  %370 = vmatprep.subr.mxu0 0.0
  %371 = vmatpush1.msra.mxu0 %v333
  %372 = vmatprep.subr.mxu0 0.0
  %373 = vmatpush1.msra.mxu0 %v334
  %374 = vmatprep.subr.mxu0 0.0
  %375 = vmatpush1.msra.mxu0 0.0
  %376 = vmatprep.subr.mxu0 0.0
  %377 = vmatpush1.msra.mxu0 0.0
  %378 = vmatprep.subr.mxu0 0.0
  %379 = vmatpush1.msra.mxu0 0.0
  %380 = vmatprep.subr.mxu0 0.0
  %381 = vmatpush1.msra.mxu0 0.0
  %382 = vmatprep.subr.mxu0 0.0
  %383 = vmatpush1.msra.mxu0 0.0
  %384 = vmatprep.subr.mxu0 0.0
  %385 = vmatpush1.msra.mxu0 0.0
  %386 = vmatprep.subr.mxu0 0.0
  %387 = vmatpush1.msra.mxu0 0.0
  %388 = vmatprep.subr.mxu0 0.0
  %389 = vmatpush1.msra.mxu0 0.0
  %390 = vmatprep.subr.mxu0 0.0
  %391 = vmatpush1.msra.mxu0 0.0
  %392 = vmatprep.subr.mxu0 0.0
  %393 = vmatpush1.msra.mxu0 0.0
  %394 = vmatprep.subr.mxu0 0.0
  %395 = vmatpush1.msra.mxu0 0.0
  %396 = vmatprep.subr.mxu0 0.0
  %397 = vmatpush1.msra.mxu0 0.0
  %398 = vmatprep.subr.mxu0 0.0
  %399 = vmatpush1.msra.mxu0 0.0
  %400 = vmatprep.subr.mxu0 0.0
  %401 = vmatpush1.msra.mxu0 0.0
  %402 = vmatprep.subr.mxu0 0.0
  %403 = vmatpush1.msra.mxu0 0.0
  %404 = vmatprep.subr.mxu0 0.0
  %405 = vmatpush1.msra.mxu0 0.0
  %406 = vmatprep.mubr.f32.mxu0 0.0
  %407 = vmatmul.mubr.f32.gmra.mrb[0].mxu0 %v311
  %v408 = vpop.f32.mrb[0].mxu0
  %v409 = vadd.f32 %v340, %v408
  %v410 = vpop.f32.mrb[0].mxu0
  %411 = vmatprep.mubr.f32.mxu0 0.0
  %412 = vmatmul.mubr.f32.gmra.mrb[0].mxu0 %v312
  %v413 = vpop.f32.mrb[0].mxu0
  %v414 = vadd.f32 %v340, %v413
  %v415 = vpop.f32.mrb[0].mxu0
  %416 = vmatprep.mubr.f32.mxu0 0.0
  %417 = vmatmul.mubr.f32.gmra.mrb[0].mxu0 %v313
  %v418 = vpop.f32.mrb[0].mxu0
  %v419 = vadd.f32 %v340, %v418
  %v420 = vpop.f32.mrb[0].mxu0
  %421 = vmatprep.mubr.f32.mxu0 0.0
  %422 = vmatmul.mubr.f32.gmra.mrb[0].mxu0 %v314
  %v423 = vpop.f32.mrb[0].mxu0
  %v424 = vadd.f32 %v340, %v423
  %v425 = vpop.f32.mrb[0].mxu0
  %426 = vmatprep.mubr.f32.mxu0 0.0
  %427 = vmatmul.mubr.f32.gmra.mrb[0].mxu0 %v315
  %v428 = vpop.f32.mrb[0].mxu0
  %v429 = vadd.f32 %v340, %v428
  %v430 = vpop.f32.mrb[0].mxu0
  %431 = vmatprep.mubr.f32.mxu0 0.0
  %432 = vmatmul.mubr.f32.gmra.mrb[0].mxu0 %v316
  %v433 = vpop.f32.mrb[0].mxu0
  %v434 = vadd.f32 %v340, %v433
  %v435 = vpop.f32.mrb[0].mxu0
  %436 = vmatprep.mubr.f32.mxu0 0.0
  %437 = vmatmul.mubr.f32.gmra.mrb[0].mxu0 %v317
  %v438 = vpop.f32.mrb[0].mxu0
  %v439 = vadd.f32 %v340, %v438
  %v440 = vpop.f32.mrb[0].mxu0
  %441 = vmatprep.mubr.f32.mxu0 0.0
  %442 = vmatmul.mubr.f32.gmra.mrb[0].mxu0 %v318
  %v443 = vpop.f32.mrb[0].mxu0
  %v444 = vadd.f32 %v340, %v443
  %v445 = vpop.f32.mrb[0].mxu0
  %446 = vdwg.mxu0
  %vm447 = vcmask 64512
  %448 = vst.msk [vmem:[%s7] sm:$0xff] %vm447, %v409
  %449 = vst.msk [vmem:[%s7 + $0x8] sm:$0xff] %vm447, %v414
  %450 = vst.msk [vmem:[%s7 + $0x10] sm:$0xff] %vm447, %v419
  %451 = vst.msk [vmem:[%s7 + $0x18] sm:$0xff] %vm447, %v424
  %452 = vst.msk [vmem:[%s7 + $0x20] sm:$0xff] %vm447, %v429
  %453 = vst.msk [vmem:[%s7 + $0x28] sm:$0xff] %vm447, %v434
  %454 = vst.msk [vmem:[%s7 + $0x30] sm:$0xff] %vm447, %v439
  %455 = vst.msk [vmem:[%s7 + $0x38] sm:$0xff] %vm447, %v444
  // Predicated region
  $region30: #{dqn_forward.1} parent=0 // pred_check
    _
  $region31: #{dqn_forward.1} parent=0 // pred_check_branch
    %457 = sbr.rel (0) target = $region33
  $region32: #{dqn_forward.1} parent=0 // pred_region
    _
  $region33: #{dqn_forward.1} parent=0 // pred_fallthru
    _
  // Predicated region
  $region34: #{dqn_forward.1} parent=0 // pred_check
    _
  $region35: #{dqn_forward.1} parent=0 // pred_check_branch
    %459 = sbr.rel (0) target = $region37
  $region36: #{dqn_forward.1} parent=0 // pred_region
    _
  $region37: #{dqn_forward.1} parent=0 // pred_fallthru
    _

</llo_original>
